<compile_context>
chip_gen: v6e
topology: v6e:2x2x1
jax: 0.10.0
libtpu: 0.0.40
codegen_flags: <defaults>
</compile_context>

<pallas_src>
import functools

import jax
import jax.numpy as jnp
from jax.experimental import pallas as pl
from jax.experimental.pallas import tpu as pltpu

LANE = 128
SUBLANE = 8
MIN_TILE_ROWS = 16  # multiple of the sublane tile for f32 (8) and 16-bit (16) dtypes


def _round_up(a, b):
    return ((a + b - 1) // b) * b


def _round_down(a, b):
    return (a // b) * b


def _tpu_profile():
    """Per-generation defaults: bytes per input block, #TC splits, VMEM cap."""
    try:
        kind = jax.devices()[0].device_kind.lower()
    except Exception:  # pragma: no cover - CPU tracing / odd backends
        kind = ""
    if "v7" in kind:
        # 2 TensorCores per chip but only 64 MiB VMEM: modest tiles, split grid.
        return {"block_bytes": 4 << 20, "num_splits": 2, "vmem_cap": 56 << 20}
    if "v4" in kind or "v5p" in kind:
        # Megacore (2 TCs per device), 128 MiB VMEM.
        return {"block_bytes": 8 << 20, "num_splits": 2, "vmem_cap": 104 << 20}
    if "v5" in kind or "v6" in kind:
        # Single TensorCore (v5e / v6e), 128 MiB VMEM: no split, big tiles.
        return {"block_bytes": 8 << 20, "num_splits": 1, "vmem_cap": 104 << 20}
    # Unknown chip: conservative settings.
    return {"block_bytes": 4 << 20, "num_splits": 1, "vmem_cap": 40 << 20}


def _charbonnier_kernel(x_ref, y_ref, out_ref, *, eps, n_true, tile_rows,
                        block_elems, steps_per_split, exact_tiling):
    c = pl.program_id(0)  # TensorCore split ("parallel" axis)
    i = pl.program_id(1)  # reduction step within the split ("arbitrary" axis)

    @pl.when(i == 0)
    def _init():
        out_ref[...] = jnp.zeros_like(out_ref)

    eps2 = jnp.float32(float(eps) ** 2)

    def tile_loss():
        xv = x_ref[...]
        yv = y_ref[...]
        if xv.ndim == 1:
            # Unpadded 1-D path: fold the block to a lane-dense 2-D view.
            xv = xv.reshape(tile_rows, LANE)
            yv = yv.reshape(tile_rows, LANE)
        d = xv.astype(jnp.float32) - yv.astype(jnp.float32)
        return jnp.sqrt(d * d + eps2)

    def accumulate(v):
        # Fold groups of SUBLANE rows into the resident (8, 128) accumulator
        # (pure VPU adds, no cross-lane work).  f32 accumulation is a few ULPs
        # for very large n — fine for a loss value.
        out_ref[...] += v.reshape(tile_rows // SUBLANE, SUBLANE, LANE).sum(axis=0)

    if exact_tiling:
        # Grid tiles the data exactly: no masking anywhere.
        accumulate(tile_loss())
    else:
        # Unclamped flat element offset of this block (int32; wrapper asserts
        # the tensor is small enough for this not to overflow).
        block_start = (c * steps_per_split + i) * block_elems
        rem = n_true - block_start  # valid elements in this block (scalar)

        @pl.when(rem >= block_elems)  # interior block: unmasked fast path
        def _interior():
            accumulate(tile_loss())

        @pl.when(jnp.logical_and(rem > 0, rem < block_elems))  # ragged tail
        def _tail():
            v = tile_loss()
            row_ids = jax.lax.broadcasted_iota(jnp.int32, (tile_rows, LANE), 0)
            lane_ids = jax.lax.broadcasted_iota(jnp.int32, (tile_rows, LANE), 1)
            in_bounds = row_ids * LANE + lane_ids < rem
            # Keep the select (NOT a 0/1 multiply): the OOB region of the VMEM
            # buffer holds garbage that may be NaN/Inf.
            accumulate(jnp.where(in_bounds, v, 0.0))
        # rem <= 0: clamped duplicate block from an uneven split -> skip.


def charbonnier_loss(x, y, eps=1e-3, tile_rows=None, num_splits=None):
    assert x.shape == y.shape, "x and y must have the same shape"
    n = int(x.size)
    assert n > 0

    prof = _tpu_profile()
    itemsize = x.dtype.itemsize
    if num_splits is None:
        num_splits = prof["num_splits"]
    if tile_rows is None:
        # Fixed bytes per input block regardless of dtype (16-bit gets 2x rows).
        tile_rows = max(MIN_TILE_ROWS, prof["block_bytes"] // (LANE * itemsize))
    tile_rows = max(MIN_TILE_ROWS, _round_up(int(tile_rows), MIN_TILE_ROWS))

    xf = x.reshape(-1)
    yf = y.reshape(-1)

    if n % LANE == 0 and n >= MIN_TILE_ROWS * LANE:
        # Free (bitcast) lane-dense 2-D view; no padding, no HBM copies.
        rows = n // LANE
        tile_rows = min(tile_rows, _round_down(rows, MIN_TILE_ROWS))
        x_in = xf.reshape(rows, LANE)
        y_in = yf.reshape(rows, LANE)
        block_elems = tile_rows * LANE
        num_blocks = pl.cdiv(rows, tile_rows)
        in_block = (tile_rows, LANE)
        one_d = False
    elif n >= MIN_TILE_ROWS * LANE:
        # Element count not a lane multiple: feed the UNPADDED 1-D arrays (no
        # jnp.pad full copy).  The kernel reshapes each block and masks the
        # ragged tail in place.
        tile_rows = min(tile_rows, _round_down(n // LANE, MIN_TILE_ROWS))
        x_in, y_in = xf, yf
        block_elems = tile_rows * LANE
        num_blocks = pl.cdiv(n, block_elems)
        in_block = (block_elems,)
        one_d = True
    else:
        # Tiny input (< 2048 elements): one padded block is cheapest; padded
        # entries are masked off in-kernel (they must not contribute eps each).
        pad = MIN_TILE_ROWS * LANE - n
        xf = jnp.pad(xf, (0, pad))
        yf = jnp.pad(yf, (0, pad))
        tile_rows = MIN_TILE_ROWS
        x_in = xf.reshape(MIN_TILE_ROWS, LANE)
        y_in = yf.reshape(MIN_TILE_ROWS, LANE)
        block_elems = tile_rows * LANE
        num_blocks = 1
        in_block = (tile_rows, LANE)
        one_d = False

    num_splits = max(1, min(int(num_splits), num_blocks))
    steps = pl.cdiv(num_blocks, num_splits)
    exact_tiling = (num_splits * steps * block_elems == n)

    # In-kernel flat offsets are int32.
    assert n + (num_splits + 1) * block_elems < 2 ** 31, (
        "charbonnier_loss: tensor too large for int32 in-kernel indexing")

    if one_d:
        def in_map(c, i):
            return (jnp.minimum(c * steps + i, num_blocks - 1),)
    else:
        def in_map(c, i):
            return (jnp.minimum(c * steps + i, num_blocks - 1), 0)

    kernel = functools.partial(
        _charbonnier_kernel,
        eps=float(eps),
        n_true=n,
        tile_rows=tile_rows,
        block_elems=block_elems,
        steps_per_split=steps,
        exact_tiling=exact_tiling,
    )

    # VMEM budget: 2 inputs x 2 pipeline buffers x block, plus headroom for
    # f32 intermediates inside the kernel, capped per chip generation.
    block_bytes = block_elems * itemsize
    interm_bytes = block_elems * 4
    vmem_limit = 4 * block_bytes + 4 * interm_bytes + (8 << 20)
    vmem_limit = int(min(max(vmem_limit, 16 << 20), prof["vmem_cap"]))

    cost = pl.CostEstimate(
        flops=5 * n,
        transcendentals=n,
        bytes_accessed=2 * n * itemsize + num_splits * SUBLANE * LANE * 4,
    )

    # TODO(synk): on v7x, verify with a profile that the leading "parallel"
    # axis is actually sharded across both TensorCores; if not, switch it to
    # pltpu.CORE_PARALLEL.
    partials = pl.pallas_call(
        kernel,
        out_shape=jax.ShapeDtypeStruct((num_splits * SUBLANE, LANE), jnp.float32),
        grid_spec=pltpu.PrefetchScalarGridSpec(
            num_scalar_prefetch=0,
            grid=(num_splits, steps),
            in_specs=[pl.BlockSpec(in_block, in_map),
                      pl.BlockSpec(in_block, in_map)],
            out_specs=pl.BlockSpec((SUBLANE, LANE), lambda c, i: (c, 0)),
        ),
        compiler_params=pltpu.CompilerParams(
            dimension_semantics=("parallel", "arbitrary"),
            vmem_limit_bytes=vmem_limit,
        ),
        cost_estimate=cost,
    )(x_in, y_in)

    # Tiny final reduction (num_splits * 8 * 128 elements) + true mean.
    return jnp.sum(partials) / n


if __name__ == "__main__":
    key = jax.random.PRNGKey(0)

    def ref_loss(a, b, eps=1e-3):
        d = a.astype(jnp.float32) - b.astype(jnp.float32)
        return jnp.mean(jnp.sqrt(d * d + eps * eps))

    # 1) Primary case: NCHW input, n % 128 == 0 (2-D path, exact tiling).
    kx, ky = jax.random.split(key)
    x = jax.random.normal(kx, (2, 4, 16, 16), dtype=jnp.float32)
    y = jax.random.normal(ky, (2, 4, 16, 16), dtype=jnp.float32)
    out = charbonnier_loss(x, y, eps=1e-3)
    jax.block_until_ready(out)
    assert jnp.allclose(out, ref_loss(x, y), rtol=1e-5, atol=1e-6), out

    # 2) Multi-block grid with a ragged last row-block (small tile override).
    kx, ky = jax.random.split(ky)
    x2 = jax.random.normal(kx, (2, 9, 16, 16), dtype=jnp.float32)
    y2 = jax.random.normal(ky, (2, 9, 16, 16), dtype=jnp.float32)
    out2 = charbonnier_loss(x2, y2, eps=1e-3, tile_rows=16)
    jax.block_until_ready(out2)
    assert jnp.allclose(out2, ref_loss(x2, y2), rtol=1e-5, atol=1e-6), out2

    # 3) Tiny input, element count not a multiple of 128 (padded one-block path).
    kx, ky = jax.random.split(ky)
    x3 = jax.random.normal(kx, (3, 5, 7, 11), dtype=jnp.float32)
    y3 = jax.random.normal(ky, (3, 5, 7, 11), dtype=jnp.float32)
    out3 = charbonnier_loss(x3, y3, eps=1e-3)
    jax.block_until_ready(out3)
    assert jnp.allclose(out3, ref_loss(x3, y3), rtol=1e-5, atol=1e-6), out3

    # 4) Larger input, element count not a multiple of 128 (unpadded 1-D path
    #    with in-kernel fold + gated tail mask).
    kx, ky = jax.random.split(ky)
    x4 = jax.random.normal(kx, (3, 5, 17, 19), dtype=jnp.float32)
    y4 = jax.random.normal(ky, (3, 5, 17, 19), dtype=jnp.float32)
    out4 = charbonnier_loss(x4, y4, eps=1e-3)
    jax.block_until_ready(out4)
    assert jnp.allclose(out4, ref_loss(x4, y4), rtol=1e-5, atol=1e-6), out4

    # 5) Uneven 2-way split exercises the clamped-duplicate skip path
    #    (a sequential loop on single-TC chips, two cores on v7x/megacore).
    out5 = charbonnier_loss(x2, y2, eps=1e-3, tile_rows=16, num_splits=2)
    jax.block_until_ready(out5)
    assert jnp.allclose(out5, ref_loss(x2, y2), rtol=1e-5, atol=1e-6), out5

    print("KERNEL_OK")
</pallas_src>

<mosaic_0001>
module attributes {stable_mosaic.version = 11 : i64} {
  func.func @_charbonnier_kernel(%arg0: i32, %arg1: i32, %arg2: memref<16x128xf32, #tpu.memory_space<vmem>>, %arg3: memref<16x128xf32, #tpu.memory_space<vmem>>, %arg4: memref<8x128xf32, #tpu.memory_space<vmem>>) attributes {dimension_semantics = [#tpu.dimension_semantics<parallel>, #tpu.dimension_semantics<arbitrary>], iteration_bounds = array<i64: 1, 1>, scalar_prefetch = 0 : i64, scratch_operands = 0 : i64, tpu.core_type = #tpu.core_type<tc>, window_params = [{transform_indices = @transform_0, window_bounds = array<i64: 16, 128>}, {transform_indices = @transform_1, window_bounds = array<i64: 16, 128>}, {transform_indices = @transform_2, window_bounds = array<i64: 8, 128>}]} {
    %c0_i32 = arith.constant 0 : i32
    %0 = arith.cmpi eq, %arg1, %c0_i32 : i32
    %1 = arith.extui %0 : i1 to i32
    %c0_i32_0 = arith.constant 0 : i32
    %2 = arith.cmpi ne, %1, %c0_i32_0 : i32
    scf.if %2 {
      %cst_9 = arith.constant 0.000000e+00 : f32
      %15 = vector.broadcast %cst_9 : f32 to vector<8x128xf32>
      %c0_10 = arith.constant 0 : index
      %c0_11 = arith.constant 0 : index
      %16 = vector.load %arg4[%c0_10, %c0_11] : memref<8x128xf32, #tpu.memory_space<vmem>>, vector<8x128xf32>
      tpu.vector_store %arg4[%c0_10, %c0_11], %15 {strides = array<i32>} : memref<8x128xf32, #tpu.memory_space<vmem>>, vector<8x128xf32>,
    } else {
    }
    %c0 = arith.constant 0 : index
    %c0_1 = arith.constant 0 : index
    %3 = vector.load %arg2[%c0, %c0_1] : memref<16x128xf32, #tpu.memory_space<vmem>>, vector<16x128xf32>
    %c0_2 = arith.constant 0 : index
    %c0_3 = arith.constant 0 : index
    %4 = vector.load %arg3[%c0_2, %c0_3] : memref<16x128xf32, #tpu.memory_space<vmem>>, vector<16x128xf32>
    %5 = arith.subf %3, %4 : vector<16x128xf32>
    %6 = arith.mulf %5, %5 : vector<16x128xf32>
    %cst = arith.constant 9.99999997E-7 : f32
    %7 = vector.broadcast %cst : f32 to vector<16x128xf32>
    %8 = arith.addf %6, %7 : vector<16x128xf32>
    %9 = math.sqrt %8 : vector<16x128xf32>
    %c0_4 = arith.constant 0 : index
    %c0_5 = arith.constant 0 : index
    %10 = vector.load %arg4[%c0_4, %c0_5] : memref<8x128xf32, #tpu.memory_space<vmem>>, vector<8x128xf32>
    %11 = vector.shape_cast %9 : vector<16x128xf32> to vector<2x8x128xf32>
    %cst_6 = arith.constant dense<0.000000e+00> : vector<8x128xf32>
    %12 = vector.multi_reduction <add>, %11, %cst_6 [0] : vector<2x8x128xf32> to vector<8x128xf32>
    %13 = arith.addf %10, %12 : vector<8x128xf32>
    %c0_7 = arith.constant 0 : index
    %c0_8 = arith.constant 0 : index
    %14 = vector.load %arg4[%c0_7, %c0_8] : memref<8x128xf32, #tpu.memory_space<vmem>>, vector<8x128xf32>
    tpu.vector_store %arg4[%c0_7, %c0_8], %13 {strides = array<i32>} : memref<8x128xf32, #tpu.memory_space<vmem>>, vector<8x128xf32>,
    return
  }
  func.func @transform_0(%arg0: i32, %arg1: i32) -> (i32, i32) {
    %c1_i32 = arith.constant 1 : i32
    %0 = arith.muli %arg0, %c1_i32 : i32
    %1 = arith.addi %0, %arg1 : i32
    %c0_i32 = arith.constant 0 : i32
    %2 = arith.minsi %1, %c0_i32 : i32
    %c0_i32_0 = arith.constant 0 : i32
    %c0_i32_1 = arith.constant 0 : i32
    return %2, %c0_i32_0 : i32, i32
  }
  func.func @transform_1(%arg0: i32, %arg1: i32) -> (i32, i32) {
    %c1_i32 = arith.constant 1 : i32
    %0 = arith.muli %arg0, %c1_i32 : i32
    %1 = arith.addi %0, %arg1 : i32
    %c0_i32 = arith.constant 0 : i32
    %2 = arith.minsi %1, %c0_i32 : i32
    %c0_i32_0 = arith.constant 0 : i32
    %c0_i32_1 = arith.constant 0 : i32
    return %2, %c0_i32_0 : i32, i32
  }
  func.func @transform_2(%arg0: i32, %arg1: i32) -> (i32, i32) {
    %c0_i32 = arith.constant 0 : i32
    %c0_i32_0 = arith.constant 0 : i32
    return %arg0, %c0_i32 : i32, i32
  }
}

</mosaic_0001>

<llo_original>
// kernel: tpu_custom_call.1
$region0: #{tpu_custom_call.1}
  #allocation0 [shape = 'u32[]', space=smem, size = 0x4, offset = 0x4, fixed_abs, tag = 'smem constant byte address 0x4 - core index']
  #allocation1 [shape = 'u32[144,128]{1,0:T(1,128)}', space=vmem, size = 0x12000, scoped, tag = 'internal scratch']
  %s0 = inlined_call_operand.hbm [shape: f32[16,128], index: 0, kind: input, shape index: {}]
  %s1 = inlined_call_operand.hbm [shape: f32[16,128], index: 1, kind: input, shape index: {}]
  %s2 = inlined_call_operand.hbm [shape: f32[8,128], index: 2, kind: output, shape index: {}]
  %s3 = sld [smem:[#allocation0]]
  $region30: #{tpu_custom_call.1} parent=0
    _
  %s5 = ssub.s32 1, %s3
  %s6 = scalar_select 0, %s5, %s3
  $region1: #{tpu_custom_call.1} parent=0
    #allocation2 [shape = 'u8[8192]{0}', space=vmem, size = 0x2000, scoped, tag = 'input window, operand 0, single buffered']
    #allocation3 [shape = 's32[1]{0}', space=sflag, size = 0x4, scoped, tag = 'scoped memory for tpu_custom_call.1']
    #allocation4 [shape = 's32[1]{0}', space=sflag, size = 0x4, scoped, tag = 'scoped memory for tpu_custom_call.1']
    #allocation5 [shape = 'u8[8192]{0}', space=vmem, size = 0x2000, scoped, tag = 'input window, operand 1, single buffered']
    #allocation6 [shape = 's32[1]{0}', space=sflag, size = 0x4, scoped, tag = 'scoped memory for tpu_custom_call.1']
    #allocation7 [shape = 'u8[4096]{0}', space=vmem, size = 0x1000, scoped, tag = 'output window, operand 0, single buffered']
    %7 = vsyncpa [#allocation3], 0
    %8 = vsyncpa [#allocation6], 0
    %9 = vsyncpa [#allocation4], 0
    // Predicated region
    $region2: #{tpu_custom_call.1} parent=1 // pred_check
      _
    $region3: #{tpu_custom_call.1} parent=1 // pred_check_branch
      %11 = sbr.rel (0) target = $region5
    $region4: #{tpu_custom_call.1} parent=1 // pred_region
      %s12 = sadd.s32 0, 0
      %p13 = scmp.lt.s32.totalorder %s12, 0
      %s14 = scalar_select %p13, %s12, 0
      %s15 = smul.u32 2, %s14
      %s17 = ssub.s32 256, 256
      %18 = vsyncadd [#allocation3], %s17
      %s19 = smul.addr %s15, 128
      %s20 = scalar_lea.hbm %s0, %s19
      %s21 = sshll.u32 [#allocation2], 4
      %s22 = int_to_ptr.vmem [resolvable:$true] %s21
      %27 = dma.hbm_to_vmem [thread:$0]  %s20, 256, %s22, [#allocation3], 128, 128, 8
    $region5: #{tpu_custom_call.1} parent=1 // pred_fallthru
      _
    // Predicated region
    $region6: #{tpu_custom_call.1} parent=1 // pred_check
      _
    $region7: #{tpu_custom_call.1} parent=1 // pred_check_branch
      %29 = sbr.rel (0) target = $region9
    $region8: #{tpu_custom_call.1} parent=1 // pred_region
      %s30 = sadd.s32 0, 0
      %p31 = scmp.lt.s32.totalorder %s30, 0
      %s32 = scalar_select %p31, %s30, 0
      %s33 = smul.u32 2, %s32
      %s35 = ssub.s32 256, 256
      %36 = vsyncadd [#allocation6], %s35
      %s37 = smul.addr %s33, 128
      %s38 = scalar_lea.hbm %s1, %s37
      %s39 = sshll.u32 [#allocation5], 4
      %s40 = int_to_ptr.vmem [resolvable:$true] %s39
      %45 = dma.hbm_to_vmem [thread:$0]  %s38, 256, %s40, [#allocation6], 128, 128, 8
    $region9: #{tpu_custom_call.1} parent=1 // pred_fallthru
      _
    // Predicated region
    $region10: #{tpu_custom_call.1} parent=1 // pred_check
      _
    $region11: #{tpu_custom_call.1} parent=1 // pred_check_branch
      %47 = sbr.rel (0) target = $region13
    $region12: #{tpu_custom_call.1} parent=1 // pred_region
      %48 = dma.done [#allocation3], 256
    $region13: #{tpu_custom_call.1} parent=1 // pred_fallthru
      _
    // Predicated region
    $region14: #{tpu_custom_call.1} parent=1 // pred_check
      _
    $region15: #{tpu_custom_call.1} parent=1 // pred_check_branch
      %50 = sbr.rel (0) target = $region17
    $region16: #{tpu_custom_call.1} parent=1 // pred_region
      %51 = dma.done [#allocation6], 256
    $region17: #{tpu_custom_call.1} parent=1 // pred_fallthru
      _
    %s52 = sadd.s32 0, 0
    %p53 = scmp.lt.s32.totalorder %s52, 0
    %s54 = scalar_select %p53, %s52, 0
    %s55 = smul.u32 2, %s54
    %s56 = sadd.s32 0, 0
    %p57 = scmp.lt.s32.totalorder %s56, 0
    %s58 = scalar_select %p57, %s56, 0
    %s59 = smul.u32 2, %s58
    %p60 = scmp.eq.s32.totalorder 0, 0
    // Predicated region
    $region18: #{tpu_custom_call.1} parent=1 // pred_check
      %p61 = pneg %p60
    $region19: #{tpu_custom_call.1} parent=1 // pred_check_branch
      %63 = sbr.rel (%p61) target = $region21
    $region20: #{tpu_custom_call.1} parent=1 // pred_region
      %64 = vst [vmem:[#allocation7] sm:$0xff] 0.0
    $region21: #{tpu_custom_call.1} parent=1 // pred_fallthru
      _
    %v65 = vld [vmem:[#allocation2] sm:$0xff]
    %v66 = vld [vmem:[#allocation2 + $0x8] sm:$0xff]
    %v67 = vld [vmem:[#allocation5] sm:$0xff]
    %v68 = vld [vmem:[#allocation5 + $0x8] sm:$0xff]
    %v69 = vsub.f32 %v65, %v67
    %v70 = vsub.f32 %v66, %v68
    %v71 = vmul.f32 %v69, %v69
    %v72 = vmul.f32 %v70, %v70
    %v73 = vadd.f32 %v71, 1e-06
    %v74 = vadd.f32 %v72, 1e-06
    %v75 = vrsqrt.pop %v73
    %v76 = vmul.f32 %v73, %v75
    %vm77 = vcmp.eq.f32.partialorder %v73, inf
    %v78 = vsel %vm77, %v73, %v76
    %vm79 = vcmp.eq.f32.partialorder %v73, 0.0
    %v80 = vand.u32 %v73, 2147483648
    %v81 = vsel %vm79, %v80, %v78
    %v82 = vrsqrt.pop %v74
    %v83 = vmul.f32 %v74, %v82
    %vm84 = vcmp.eq.f32.partialorder %v74, inf
    %v85 = vsel %vm84, %v74, %v83
    %vm86 = vcmp.eq.f32.partialorder %v74, 0.0
    %v87 = vand.u32 %v74, 2147483648
    %v88 = vsel %vm86, %v87, %v85
    %v89 = vld [vmem:[#allocation7] sm:$0xff]
    %v90 = vadd.f32 %v81, %v88
    %v91 = vadd.f32 %v89, %v90
    %92 = vst [vmem:[#allocation7] sm:$0xff] %v91
    // Predicated region
    $region22: #{tpu_custom_call.1} parent=1 // pred_check
      _
    $region23: #{tpu_custom_call.1} parent=1 // pred_check_branch
      %94 = sbr.rel (0) target = $region25
    $region24: #{tpu_custom_call.1} parent=1 // pred_region
      %s96 = ssub.s32 128, 128
      %97 = vsyncadd [#allocation4], %s96
      %s99 = sshll.u32 [#allocation7], 4
      %s100 = int_to_ptr.vmem [resolvable:$true] %s99
      %102 = dma.vmem_to_hbm [thread:$0]  %s100, 128, %s2, [#allocation4]
    $region25: #{tpu_custom_call.1} parent=1 // pred_fallthru
      _
    // Predicated region
    $region26: #{tpu_custom_call.1} parent=1 // pred_check
      _
    $region27: #{tpu_custom_call.1} parent=1 // pred_check_branch
      %104 = sbr.rel (0) target = $region29
    $region28: #{tpu_custom_call.1} parent=1 // pred_region
      %105 = dma.done [#allocation4], 128
    $region29: #{tpu_custom_call.1} parent=1 // pred_fallthru
      _
    %106 = vsyncpa [#allocation3], 1
    %107 = vsyncpa [#allocation6], 1
    %108 = vsyncpa [#allocation4], 1

</llo_original>
